<compile_context>
chip_gen: v7x
topology: tpu7x:2x2x1
jax: 0.10.0
libtpu: 0.0.40
codegen_flags: <defaults>
</compile_context>

<pallas_src>
import functools

import jax
import jax.numpy as jnp
from jax.experimental import pallas as pl
from jax.experimental.pallas import tpu as pltpu


def _round_up(x, m):
    return ((x + m - 1) // m) * m


def _fused_mlp_kernel(ev_ref, co_ref, wfe_ref, wfc_ref, bf_ref, w2_ref, b2_ref,
                      out_ref):
    # Batch-in-lanes: activations are feature-major [feat, TB], so the batch
    # dim maps to MXU lanes.  f32 accumulation throughout.
    #   h_T = relu(WfE @ evT + WfC @ coT + bf)          [128, TB]
    h = jnp.dot(wfe_ref[...], ev_ref[...], preferred_element_type=jnp.float32)
    h = h + jnp.dot(wfc_ref[...], co_ref[...],
                    preferred_element_type=jnp.float32)
    h = jnp.maximum(h + bf_ref[...], 0.0)
    # TODO(synk): training-mode Dropout(0.3) (prng mask + 1/(1-p) scale) not
    # implemented; inference treats it as identity.
    #   out_T = W2 @ h_T + b2                           [2, TB]  lane-dense vst
    out = jnp.dot(w2_ref[...], h.astype(w2_ref.dtype),
                  preferred_element_type=jnp.float32) + b2_ref[...]
    out_ref[...] = out.astype(out_ref.dtype)


def prepare_params(params, compute_dtype=jnp.bfloat16):
    """One-time fold of the projection linears into fusion layer-1 (transposed).

    Returns (WfE_T [128,E], WfC_T [128,C], bf [128,1], W2 [2,128], b2 [2,1]).
    bf16 by default (deployment path); biases stay f32.
    """
    (we, be, wc, bc, w1, b1, w2, b2) = params
    hidden = w1.shape[0]                 # 128
    w1a = w1[:, :hidden]                 # multiplies event_proj half
    w1b = w1[:, hidden:]                 # multiplies coord_proj half

    wfe_t = w1a @ we                     # [128, E]  == (we.T @ w1a.T).T
    wfc_t = w1b @ wc                     # [128, C]
    bf = be @ w1a.T + bc @ w1b.T + b1    # [128]

    return (wfe_t.astype(compute_dtype),
            wfc_t.astype(compute_dtype),
            bf.reshape(-1, 1).astype(jnp.float32),
            w2.astype(compute_dtype),                  # [2, 128] PyTorch layout
            b2.reshape(-1, 1).astype(jnp.float32))


def _choose_tile(B, block_b):
    """Pick (tb, b_pad): >=ceil(B/block_b) steps, prefer >=4 steps (v7x
    megacore + pipeline overlap), lane-granular (128) tiles so padding waste
    stays < one tile; tiny batches get a single full-array block."""
    n_steps = max(pl.cdiv(B, block_b), 4)
    tb = _round_up(pl.cdiv(B, n_steps), 128)
    if tb >= B:                      # small batch: one block == full array
        tb = _round_up(B, 8)
    b_pad = _round_up(B, tb)
    return tb, b_pad


@functools.partial(jax.jit, static_argnames=("block_b",))
def fuse_grunet_forward(event_feature, coord_feature, prepared, *, block_b=1024):
    """Fused forward. event_feature [B,E], coord_feature [B,C] -> [B,2] f32."""
    wfe_t, wfc_t, bf_col, w2, b2_col = prepared
    B = event_feature.shape[0]
    hidden, E = wfe_t.shape
    C = wfc_t.shape[1]
    out_dim = w2.shape[0]
    cdtype = wfe_t.dtype

    # Feature-major (batch-in-lanes) activations; no concat — the two feature
    # tensors go to the kernel separately against the split folded weights.
    ev_t = event_feature.astype(cdtype).T        # [E, B]
    co_t = coord_feature.astype(cdtype).T        # [C, B]

    tb, b_pad = _choose_tile(B, block_b)
    if b_pad != B:
        ev_t = jnp.pad(ev_t, ((0, 0), (0, b_pad - B)))
        co_t = jnp.pad(co_t, ((0, 0), (0, b_pad - B)))
    grid = (b_pad // tb,)

    itemsize = jnp.dtype(cdtype).itemsize
    cost = pl.CostEstimate(
        flops=2 * b_pad * hidden * (E + C) + 2 * b_pad * out_dim * hidden,
        transcendentals=0,
        bytes_accessed=((ev_t.size + co_t.size) * itemsize
                        + (wfe_t.size + wfc_t.size + w2.size) * itemsize
                        + (bf_col.size + b2_col.size) * 4
                        + b_pad * out_dim * 4),
    )

    out_t = pl.pallas_call(
        _fused_mlp_kernel,
        out_shape=jax.ShapeDtypeStruct((out_dim, b_pad), jnp.float32),
        grid=grid,
        in_specs=[
            pl.BlockSpec((E, tb), lambda i: (0, i)),            # event.T tile (pipelined)
            pl.BlockSpec((C, tb), lambda i: (0, i)),            # coord.T tile (pipelined)
            pl.BlockSpec((hidden, E), lambda i: (0, 0)),        # WfE (VMEM-resident)
            pl.BlockSpec((hidden, C), lambda i: (0, 0)),        # WfC
            pl.BlockSpec((hidden, 1), lambda i: (0, 0)),        # bf
            pl.BlockSpec((out_dim, hidden), lambda i: (0, 0)),  # W2
            pl.BlockSpec((out_dim, 1), lambda i: (0, 0)),       # b2
        ],
        out_specs=pl.BlockSpec((out_dim, tb), lambda i: (0, i)),
        compiler_params=pltpu.CompilerParams(
            dimension_semantics=("parallel",)),
        cost_estimate=cost,
    )(ev_t, co_t, wfe_t, wfc_t, bf_col, w2, b2_col)

    # Back to [B, 2]; padded (bias-only) columns dropped — keep this slice.
    return out_t.T[:B]


def init_params(key, event_dim, coord_dim):
    """Deterministic synthetic parameters matching nn.Linear shapes."""
    ks = jax.random.split(key, 8)

    def linear(kw, kb, out_f, in_f):
        bound = 1.0 / jnp.sqrt(jnp.float32(in_f))
        w = jax.random.uniform(kw, (out_f, in_f), jnp.float32, -bound, bound)
        b = jax.random.uniform(kb, (out_f,), jnp.float32, -bound, bound)
        return w, b

    we, be = linear(ks[0], ks[1], 128, event_dim)   # event_proj
    wc, bc = linear(ks[2], ks[3], 128, coord_dim)   # coord_proj
    w1, b1 = linear(ks[4], ks[5], 128, 256)         # fusion[0]
    w2, b2 = linear(ks[6], ks[7], 2, 128)           # fusion[3]
    return (we, be, wc, bc, w1, b1, w2, b2)


def reference_forward(event_feature, coord_feature, params):
    """Pure-JAX reference (inference mode: dropout = identity)."""
    (we, be, wc, bc, w1, b1, w2, b2) = params
    ep = event_feature @ we.T + be
    cp = coord_feature @ wc.T + bc
    combined = jnp.concatenate([ep, cp], axis=1)
    h = jnp.maximum(combined @ w1.T + b1, 0.0)
    return h @ w2.T + b2


if __name__ == "__main__":
    B, EVENT_DIM, COORD_DIM = 2, 16, 8

    key = jax.random.PRNGKey(0)
    k_ev, k_co, k_param = jax.random.split(key, 3)

    event_feature = jax.random.normal(k_ev, (B, EVENT_DIM), jnp.float32)
    coord_feature = jax.random.normal(k_co, (B, COORD_DIM), jnp.float32)
    params = init_params(k_param, EVENT_DIM, COORD_DIM)

    ref = reference_forward(event_feature, coord_feature, params)

    # f32 compute path: tight check against the unfused f32 reference.
    prepared_f32 = prepare_params(params, compute_dtype=jnp.float32)
    out_f32 = jax.block_until_ready(
        fuse_grunet_forward(event_feature, coord_feature, prepared_f32))
    assert out_f32.shape == (B, 2), out_f32.shape
    assert jnp.allclose(out_f32, ref, atol=1e-4, rtol=1e-4), (out_f32, ref)

    # bf16 deployment default (half the activation DMA, ~3x fewer MXU passes):
    # loose check since the folded weights are quantized once to bf16.
    prepared_bf16 = prepare_params(params)           # compute_dtype=bfloat16
    out_bf16 = jax.block_until_ready(
        fuse_grunet_forward(event_feature, coord_feature, prepared_bf16))
    assert out_bf16.shape == (B, 2), out_bf16.shape
    assert jnp.allclose(out_bf16, ref, atol=5e-2, rtol=5e-2), (out_bf16, ref)

    print("KERNEL_OK")
</pallas_src>

<mosaic_0001>
module attributes {stable_mosaic.version = 11 : i64} {
  func.func @_fused_mlp_kernel(%arg0: i32, %arg1: memref<16x8xf32, #tpu.memory_space<vmem>>, %arg2: memref<8x8xf32, #tpu.memory_space<vmem>>, %arg3: memref<128x16xf32, #tpu.memory_space<vmem>>, %arg4: memref<128x8xf32, #tpu.memory_space<vmem>>, %arg5: memref<128x1xf32, #tpu.memory_space<vmem>>, %arg6: memref<2x128xf32, #tpu.memory_space<vmem>>, %arg7: memref<2x1xf32, #tpu.memory_space<vmem>>, %arg8: memref<2x8xf32, #tpu.memory_space<vmem>>) attributes {dimension_semantics = [#tpu.dimension_semantics<parallel>], iteration_bounds = array<i64: 1>, scalar_prefetch = 0 : i64, scratch_operands = 0 : i64, tpu.core_type = #tpu.core_type<tc>, window_params = [{transform_indices = @transform_0, window_bounds = array<i64: 16, 8>}, {transform_indices = @transform_1, window_bounds = array<i64: 8, 8>}, {pipeline_mode = #tpu.pipeline_mode<synchronous>, transform_indices = @transform_2, window_bounds = array<i64: 128, 16>}, {pipeline_mode = #tpu.pipeline_mode<synchronous>, transform_indices = @transform_3, window_bounds = array<i64: 128, 8>}, {pipeline_mode = #tpu.pipeline_mode<synchronous>, transform_indices = @transform_4, window_bounds = array<i64: 128, 1>}, {pipeline_mode = #tpu.pipeline_mode<synchronous>, transform_indices = @transform_5, window_bounds = array<i64: 2, 128>}, {pipeline_mode = #tpu.pipeline_mode<synchronous>, transform_indices = @transform_6, window_bounds = array<i64: 2, 1>}, {transform_indices = @transform_7, window_bounds = array<i64: 2, 8>}]} {
    %c0 = arith.constant 0 : index
    %c0_0 = arith.constant 0 : index
    %0 = vector.load %arg3[%c0, %c0_0] : memref<128x16xf32, #tpu.memory_space<vmem>>, vector<128x16xf32>
    %c0_1 = arith.constant 0 : index
    %c0_2 = arith.constant 0 : index
    %1 = vector.load %arg1[%c0_1, %c0_2] : memref<16x8xf32, #tpu.memory_space<vmem>>, vector<16x8xf32>
    %cst = arith.constant dense<0.000000e+00> : vector<128x8xf32>
    %2 = tpu.matmul %0, %1, %cst {dimension_numbers = #tpu.dot_dimension_numbers<[1], [0], [0], [1], [0, 0, 1, 1], [], []>} : vector<128x16xf32>, vector<16x8xf32>, vector<128x8xf32> -> vector<128x8xf32>
    %c0_3 = arith.constant 0 : index
    %c0_4 = arith.constant 0 : index
    %3 = vector.load %arg4[%c0_3, %c0_4] : memref<128x8xf32, #tpu.memory_space<vmem>>, vector<128x8xf32>
    %c0_5 = arith.constant 0 : index
    %c0_6 = arith.constant 0 : index
    %4 = vector.load %arg2[%c0_5, %c0_6] : memref<8x8xf32, #tpu.memory_space<vmem>>, vector<8x8xf32>
    %cst_7 = arith.constant dense<0.000000e+00> : vector<128x8xf32>
    %5 = tpu.matmul %3, %4, %cst_7 {dimension_numbers = #tpu.dot_dimension_numbers<[1], [0], [0], [1], [0, 0, 1, 1], [], []>} : vector<128x8xf32>, vector<8x8xf32>, vector<128x8xf32> -> vector<128x8xf32>
    %6 = arith.addf %2, %5 : vector<128x8xf32>
    %c0_8 = arith.constant 0 : index
    %c0_9 = arith.constant 0 : index
    %7 = vector.load %arg5[%c0_8, %c0_9] : memref<128x1xf32, #tpu.memory_space<vmem>>, vector<128x1xf32>
    %8 = vector.broadcast %7 : vector<128x1xf32> to vector<128x8xf32>
    %9 = arith.addf %6, %8 : vector<128x8xf32>
    %cst_10 = arith.constant 0.000000e+00 : f32
    %10 = vector.broadcast %cst_10 : f32 to vector<128x8xf32>
    %11 = arith.maximumf %9, %10 : vector<128x8xf32>
    %c0_11 = arith.constant 0 : index
    %c0_12 = arith.constant 0 : index
    %12 = vector.load %arg6[%c0_11, %c0_12] : memref<2x128xf32, #tpu.memory_space<vmem>>, vector<2x128xf32>
    %cst_13 = arith.constant dense<0.000000e+00> : vector<2x8xf32>
    %13 = tpu.matmul %12, %11, %cst_13 {dimension_numbers = #tpu.dot_dimension_numbers<[1], [0], [0], [1], [0, 0, 1, 1], [], []>} : vector<2x128xf32>, vector<128x8xf32>, vector<2x8xf32> -> vector<2x8xf32>
    %c0_14 = arith.constant 0 : index
    %c0_15 = arith.constant 0 : index
    %14 = vector.load %arg7[%c0_14, %c0_15] : memref<2x1xf32, #tpu.memory_space<vmem>>, vector<2x1xf32>
    %15 = vector.broadcast %14 : vector<2x1xf32> to vector<2x8xf32>
    %16 = arith.addf %13, %15 : vector<2x8xf32>
    %c0_16 = arith.constant 0 : index
    %c0_17 = arith.constant 0 : index
    %17 = vector.load %arg8[%c0_16, %c0_17] : memref<2x8xf32, #tpu.memory_space<vmem>>, vector<2x8xf32>
    tpu.vector_store %arg8[%c0_16, %c0_17], %16 {strides = array<i32>} : memref<2x8xf32, #tpu.memory_space<vmem>>, vector<2x8xf32>,
    return
  }
  func.func @transform_0(%arg0: i32) -> (i32, i32) {
    %c0_i32 = arith.constant 0 : i32
    %c0_i32_0 = arith.constant 0 : i32
    return %c0_i32, %arg0 : i32, i32
  }
  func.func @transform_1(%arg0: i32) -> (i32, i32) {
    %c0_i32 = arith.constant 0 : i32
    %c0_i32_0 = arith.constant 0 : i32
    return %c0_i32, %arg0 : i32, i32
  }
  func.func @transform_2(%arg0: i32) -> (i32, i32) {
    %c0_i32 = arith.constant 0 : i32
    %c0_i32_0 = arith.constant 0 : i32
    %c0_i32_1 = arith.constant 0 : i32
    return %c0_i32, %c0_i32_0 : i32, i32
  }
  func.func @transform_3(%arg0: i32) -> (i32, i32) {
    %c0_i32 = arith.constant 0 : i32
    %c0_i32_0 = arith.constant 0 : i32
    %c0_i32_1 = arith.constant 0 : i32
    return %c0_i32, %c0_i32_0 : i32, i32
  }
  func.func @transform_4(%arg0: i32) -> (i32, i32) {
    %c0_i32 = arith.constant 0 : i32
    %c0_i32_0 = arith.constant 0 : i32
    %c0_i32_1 = arith.constant 0 : i32
    return %c0_i32, %c0_i32_0 : i32, i32
  }
  func.func @transform_5(%arg0: i32) -> (i32, i32) {
    %c0_i32 = arith.constant 0 : i32
    %c0_i32_0 = arith.constant 0 : i32
    %c0_i32_1 = arith.constant 0 : i32
    return %c0_i32, %c0_i32_0 : i32, i32
  }
  func.func @transform_6(%arg0: i32) -> (i32, i32) {
    %c0_i32 = arith.constant 0 : i32
    %c0_i32_0 = arith.constant 0 : i32
    %c0_i32_1 = arith.constant 0 : i32
    return %c0_i32, %c0_i32_0 : i32, i32
  }
  func.func @transform_7(%arg0: i32) -> (i32, i32) {
    %c0_i32 = arith.constant 0 : i32
    %c0_i32_0 = arith.constant 0 : i32
    return %c0_i32, %arg0 : i32, i32
  }
}

</mosaic_0001>

<llo_original>
// kernel: fuse_grunet_forward.1
$region0: #{fuse_grunet_forward.1}
  #allocation0 [shape = 'u32[]', space=smem, size = 0x4, offset = 0x4, fixed_abs, tag = 'smem constant byte address 0x4 - core index']
  #allocation1 [shape = 'u32[144,128]{1,0:T(1,128)}', space=vmem, size = 0x12000, scoped, tag = 'internal scratch']
  %s0 = inlined_call_operand.vmem [shape: f32[16,8], index: 0, kind: input, shape index: {}]
  %s1 = inlined_call_operand.vmem [shape: f32[8,8], index: 1, kind: input, shape index: {}]
  %s2 = inlined_call_operand.vmem [shape: f32[128,16], index: 2, kind: input, shape index: {}]
  %s3 = inlined_call_operand.vmem [shape: f32[128,8], index: 3, kind: input, shape index: {}]
  %s4 = inlined_call_operand.vmem [shape: f32[128,1], index: 4, kind: input, shape index: {}]
  %s5 = inlined_call_operand.vmem [shape: f32[2,128], index: 5, kind: input, shape index: {}]
  %s6 = inlined_call_operand.vmem [shape: f32[2,1], index: 6, kind: input, shape index: {}]
  %s7 = inlined_call_operand.vmem [shape: f32[2,8], index: 7, kind: output, shape index: {}]
  %s8 = sld [smem:[#allocation0]]
  $region38: #{fuse_grunet_forward.1} parent=0
    _
  %s10 = ssub.s32 1, %s8
  %s11 = scalar_select 0, %s10, %s8
  // Predicated region
  $region2: #{fuse_grunet_forward.1} parent=0 // pred_check
    _
  $region3: #{fuse_grunet_forward.1} parent=0 // pred_check_branch
    %13 = sbr.rel (0) target = $region5
  $region4: #{fuse_grunet_forward.1} parent=0 // pred_region
    _
  $region5: #{fuse_grunet_forward.1} parent=0 // pred_fallthru
    _
  // Predicated region
  $region6: #{fuse_grunet_forward.1} parent=0 // pred_check
    _
  $region7: #{fuse_grunet_forward.1} parent=0 // pred_check_branch
    %15 = sbr.rel (0) target = $region9
  $region8: #{fuse_grunet_forward.1} parent=0 // pred_region
    _
  $region9: #{fuse_grunet_forward.1} parent=0 // pred_fallthru
    _
  // Predicated region
  $region10: #{fuse_grunet_forward.1} parent=0 // pred_check
    _
  $region11: #{fuse_grunet_forward.1} parent=0 // pred_check_branch
    %17 = sbr.rel (0) target = $region13
  $region12: #{fuse_grunet_forward.1} parent=0 // pred_region
    _
  $region13: #{fuse_grunet_forward.1} parent=0 // pred_fallthru
    _
  // Predicated region
  $region14: #{fuse_grunet_forward.1} parent=0 // pred_check
    _
  $region15: #{fuse_grunet_forward.1} parent=0 // pred_check_branch
    %19 = sbr.rel (0) target = $region17
  $region16: #{fuse_grunet_forward.1} parent=0 // pred_region
    _
  $region17: #{fuse_grunet_forward.1} parent=0 // pred_fallthru
    _
  // Predicated region
  $region18: #{fuse_grunet_forward.1} parent=0 // pred_check
    _
  $region19: #{fuse_grunet_forward.1} parent=0 // pred_check_branch
    %21 = sbr.rel (0) target = $region21
  $region20: #{fuse_grunet_forward.1} parent=0 // pred_region
    _
  $region21: #{fuse_grunet_forward.1} parent=0 // pred_fallthru
    _
  // Predicated region
  $region22: #{fuse_grunet_forward.1} parent=0 // pred_check
    _
  $region23: #{fuse_grunet_forward.1} parent=0 // pred_check_branch
    %23 = sbr.rel (0) target = $region25
  $region24: #{fuse_grunet_forward.1} parent=0 // pred_region
    _
  $region25: #{fuse_grunet_forward.1} parent=0 // pred_fallthru
    _
  // Predicated region
  $region26: #{fuse_grunet_forward.1} parent=0 // pred_check
    _
  $region27: #{fuse_grunet_forward.1} parent=0 // pred_check_branch
    %25 = sbr.rel (0) target = $region29
  $region28: #{fuse_grunet_forward.1} parent=0 // pred_region
    _
  $region29: #{fuse_grunet_forward.1} parent=0 // pred_fallthru
    _
  %v26 = vld [vmem:[%s2] sm:$0xff]
  %v27 = vld [vmem:[%s2 + $0x8] sm:$0xff]
  %v28 = vld [vmem:[%s2 + $0x10] sm:$0xff]
  %v29 = vld [vmem:[%s2 + $0x18] sm:$0xff]
  %v30 = vld [vmem:[%s2 + $0x20] sm:$0xff]
  %v31 = vld [vmem:[%s2 + $0x28] sm:$0xff]
  %v32 = vld [vmem:[%s2 + $0x30] sm:$0xff]
  %v33 = vld [vmem:[%s2 + $0x38] sm:$0xff]
  %v34 = vld [vmem:[%s2 + $0x40] sm:$0xff]
  %v35 = vld [vmem:[%s2 + $0x48] sm:$0xff]
  %v36 = vld [vmem:[%s2 + $0x50] sm:$0xff]
  %v37 = vld [vmem:[%s2 + $0x58] sm:$0xff]
  %v38 = vld [vmem:[%s2 + $0x60] sm:$0xff]
  %v39 = vld [vmem:[%s2 + $0x68] sm:$0xff]
  %v40 = vld [vmem:[%s2 + $0x70] sm:$0xff]
  %v41 = vld [vmem:[%s2 + $0x78] sm:$0xff]
  %v42 = vld [vmem:[%s0] sm:$0xff]
  %v43 = vld [vmem:[%s0 + $0x8] sm:$0xff]
  %v44 = vld [vmem:[%s3] sm:$0xff]
  %v45 = vld [vmem:[%s3 + $0x8] sm:$0xff]
  %v46 = vld [vmem:[%s3 + $0x10] sm:$0xff]
  %v47 = vld [vmem:[%s3 + $0x18] sm:$0xff]
  %v48 = vld [vmem:[%s3 + $0x20] sm:$0xff]
  %v49 = vld [vmem:[%s3 + $0x28] sm:$0xff]
  %v50 = vld [vmem:[%s3 + $0x30] sm:$0xff]
  %v51 = vld [vmem:[%s3 + $0x38] sm:$0xff]
  %v52 = vld [vmem:[%s3 + $0x40] sm:$0xff]
  %v53 = vld [vmem:[%s3 + $0x48] sm:$0xff]
  %v54 = vld [vmem:[%s3 + $0x50] sm:$0xff]
  %v55 = vld [vmem:[%s3 + $0x58] sm:$0xff]
  %v56 = vld [vmem:[%s3 + $0x60] sm:$0xff]
  %v57 = vld [vmem:[%s3 + $0x68] sm:$0xff]
  %v58 = vld [vmem:[%s3 + $0x70] sm:$0xff]
  %v59 = vld [vmem:[%s3 + $0x78] sm:$0xff]
  %v60 = vld [vmem:[%s1] sm:$0xff]
  %vm61 = vcmask 64512
  %v63 = vsel %vm61, %v44, 0
  %v66 = vsel %vm61, %v45, 0
  %v69 = vsel %vm61, %v46, 0
  %v72 = vsel %vm61, %v47, 0
  %v75 = vsel %vm61, %v48, 0
  %v78 = vsel %vm61, %v49, 0
  %v81 = vsel %vm61, %v50, 0
  %v84 = vsel %vm61, %v51, 0
  %v87 = vsel %vm61, %v52, 0
  %v90 = vsel %vm61, %v53, 0
  %v93 = vsel %vm61, %v54, 0
  %v96 = vsel %vm61, %v55, 0
  %v99 = vsel %vm61, %v56, 0
  %v102 = vsel %vm61, %v57, 0
  %v105 = vsel %vm61, %v58, 0
  %v108 = vsel %vm61, %v59, 0
  %110 = vmatprep.subr.mxu0 0.0
  %111 = vmatpush1.msra.mxu0 %v60
  %112 = vmatprep.subr.mxu0 0.0
  %113 = vmatpush1.msra.mxu0 0.0
  %114 = vmatprep.subr.mxu0 0.0
  %115 = vmatpush1.msra.mxu0 0.0
  %116 = vmatprep.subr.mxu0 0.0
  %117 = vmatpush1.msra.mxu0 0.0
  %118 = vmatprep.subr.mxu0 0.0
  %119 = vmatpush1.msra.mxu0 0.0
  %120 = vmatprep.subr.mxu0 0.0
  %121 = vmatpush1.msra.mxu0 0.0
  %122 = vmatprep.subr.mxu0 0.0
  %123 = vmatpush1.msra.mxu0 0.0
  %124 = vmatprep.subr.mxu0 0.0
  %125 = vmatpush1.msra.mxu0 0.0
  %126 = vmatprep.subr.mxu0 0.0
  %127 = vmatpush1.msra.mxu0 0.0
  %128 = vmatprep.subr.mxu0 0.0
  %129 = vmatpush1.msra.mxu0 0.0
  %130 = vmatprep.subr.mxu0 0.0
  %131 = vmatpush1.msra.mxu0 0.0
  %132 = vmatprep.subr.mxu0 0.0
  %133 = vmatpush1.msra.mxu0 0.0
  %134 = vmatprep.subr.mxu0 0.0
  %135 = vmatpush1.msra.mxu0 0.0
  %136 = vmatprep.subr.mxu0 0.0
  %137 = vmatpush1.msra.mxu0 0.0
  %138 = vmatprep.subr.mxu0 0.0
  %139 = vmatpush1.msra.mxu0 0.0
  %140 = vmatprep.subr.mxu0 0.0
  %141 = vmatpush1.msra.mxu0 0.0
  %142 = vmatprep.subr.mxu0 0.0
  %143 = vmatpush1.msra.mxu0 0.0
  %144 = vmatprep.subr.mxu0 0.0
  %145 = vmatpush1.msra.mxu0 0.0
  %146 = vmatprep.subr.mxu0 0.0
  %147 = vmatpush1.msra.mxu0 0.0
  %148 = vmatprep.subr.mxu0 0.0
  %149 = vmatpush1.msra.mxu0 0.0
  %150 = vmatprep.subr.mxu0 0.0
  %151 = vmatpush1.msra.mxu0 0.0
  %152 = vmatprep.subr.mxu0 0.0
  %153 = vmatpush1.msra.mxu0 0.0
  %154 = vmatprep.subr.mxu0 0.0
  %155 = vmatpush1.msra.mxu0 0.0
  %156 = vmatprep.subr.mxu0 0.0
  %157 = vmatpush1.msra.mxu0 0.0
  %158 = vmatprep.subr.mxu0 0.0
  %159 = vmatpush1.msra.mxu0 0.0
  %160 = vmatprep.subr.mxu0 0.0
  %161 = vmatpush1.msra.mxu0 0.0
  %162 = vmatprep.subr.mxu0 0.0
  %163 = vmatpush1.msra.mxu0 0.0
  %164 = vmatprep.subr.mxu0 0.0
  %165 = vmatpush1.msra.mxu0 0.0
  %166 = vmatprep.subr.mxu0 0.0
  %167 = vmatpush1.msra.mxu0 0.0
  %168 = vmatprep.subr.mxu0 0.0
  %169 = vmatpush1.msra.mxu0 0.0
  %170 = vmatprep.subr.mxu0 0.0
  %171 = vmatpush1.msra.mxu0 0.0
  %172 = vmatprep.subr.mxu0 0.0
  %173 = vmatpush1.msra.mxu0 0.0
  %174 = vmatprep.mubr.f32.mxu0 0.0
  %175 = vmatmul.mubr.f32.gmra.mrb[0].mxu0 %v63
  %v176 = vpop.f32.mrb[0].mxu0
  %v177 = vadd.f32 0.0, %v176
  %v178 = vpop.f32.mrb[0].mxu0
  %179 = vmatprep.mubr.f32.mxu0 0.0
  %180 = vmatmul.mubr.f32.gmra.mrb[0].mxu0 %v66
  %v181 = vpop.f32.mrb[0].mxu0
  %v182 = vadd.f32 0.0, %v181
  %v183 = vpop.f32.mrb[0].mxu0
  %184 = vmatprep.mubr.f32.mxu0 0.0
  %185 = vmatmul.mubr.f32.gmra.mrb[0].mxu0 %v69
  %v186 = vpop.f32.mrb[0].mxu0
  %v187 = vadd.f32 0.0, %v186
  %v188 = vpop.f32.mrb[0].mxu0
  %189 = vmatprep.mubr.f32.mxu0 0.0
  %190 = vmatmul.mubr.f32.gmra.mrb[0].mxu0 %v72
  %v191 = vpop.f32.mrb[0].mxu0
  %v192 = vadd.f32 0.0, %v191
  %v193 = vpop.f32.mrb[0].mxu0
  %194 = vmatprep.mubr.f32.mxu0 0.0
  %195 = vmatmul.mubr.f32.gmra.mrb[0].mxu0 %v75
  %v196 = vpop.f32.mrb[0].mxu0
  %v197 = vadd.f32 0.0, %v196
  %v198 = vpop.f32.mrb[0].mxu0
  %199 = vmatprep.mubr.f32.mxu0 0.0
  %200 = vmatmul.mubr.f32.gmra.mrb[0].mxu0 %v78
  %v201 = vpop.f32.mrb[0].mxu0
  %v202 = vadd.f32 0.0, %v201
  %v203 = vpop.f32.mrb[0].mxu0
  %204 = vmatprep.mubr.f32.mxu0 0.0
  %205 = vmatmul.mubr.f32.gmra.mrb[0].mxu0 %v81
  %v206 = vpop.f32.mrb[0].mxu0
  %v207 = vadd.f32 0.0, %v206
  %v208 = vpop.f32.mrb[0].mxu0
  %209 = vmatprep.mubr.f32.mxu0 0.0
  %210 = vmatmul.mubr.f32.gmra.mrb[0].mxu0 %v84
  %v211 = vpop.f32.mrb[0].mxu0
  %v212 = vadd.f32 0.0, %v211
  %v213 = vpop.f32.mrb[0].mxu0
  %214 = vmatprep.mubr.f32.mxu0 0.0
  %215 = vmatmul.mubr.f32.gmra.mrb[0].mxu0 %v87
  %v216 = vpop.f32.mrb[0].mxu0
  %v217 = vadd.f32 0.0, %v216
  %v218 = vpop.f32.mrb[0].mxu0
  %219 = vmatprep.mubr.f32.mxu0 0.0
  %220 = vmatmul.mubr.f32.gmra.mrb[0].mxu0 %v90
  %v221 = vpop.f32.mrb[0].mxu0
  %v222 = vadd.f32 0.0, %v221
  %v223 = vpop.f32.mrb[0].mxu0
  %224 = vmatprep.mubr.f32.mxu0 0.0
  %225 = vmatmul.mubr.f32.gmra.mrb[0].mxu0 %v93
  %v226 = vpop.f32.mrb[0].mxu0
  %v227 = vadd.f32 0.0, %v226
  %v228 = vpop.f32.mrb[0].mxu0
  %229 = vmatprep.mubr.f32.mxu0 0.0
  %230 = vmatmul.mubr.f32.gmra.mrb[0].mxu0 %v96
  %v231 = vpop.f32.mrb[0].mxu0
  %v232 = vadd.f32 0.0, %v231
  %v233 = vpop.f32.mrb[0].mxu0
  %234 = vmatprep.mubr.f32.mxu0 0.0
  %235 = vmatmul.mubr.f32.gmra.mrb[0].mxu0 %v99
  %v236 = vpop.f32.mrb[0].mxu0
  %v237 = vadd.f32 0.0, %v236
  %v238 = vpop.f32.mrb[0].mxu0
  %239 = vmatprep.mubr.f32.mxu0 0.0
  %240 = vmatmul.mubr.f32.gmra.mrb[0].mxu0 %v102
  %v241 = vpop.f32.mrb[0].mxu0
  %v242 = vadd.f32 0.0, %v241
  %v243 = vpop.f32.mrb[0].mxu0
  %244 = vmatprep.mubr.f32.mxu0 0.0
  %245 = vmatmul.mubr.f32.gmra.mrb[0].mxu0 %v105
  %v246 = vpop.f32.mrb[0].mxu0
  %v247 = vadd.f32 0.0, %v246
  %v248 = vpop.f32.mrb[0].mxu0
  %249 = vmatprep.mubr.f32.mxu0 0.0
  %250 = vmatmul.mubr.f32.gmra.mrb[0].mxu0 %v108
  %v251 = vpop.f32.mrb[0].mxu0
  %v252 = vadd.f32 0.0, %v251
  %v253 = vpop.f32.mrb[0].mxu0
  %254 = vdwg.mxu0
  %vm255 = vcmask 130048
  %v257 = vsel %vm255, %v26, 0
  %v260 = vsel %vm255, %v27, 0
  %v263 = vsel %vm255, %v28, 0
  %v266 = vsel %vm255, %v29, 0
  %v269 = vsel %vm255, %v30, 0
  %v272 = vsel %vm255, %v31, 0
  %v275 = vsel %vm255, %v32, 0
  %v278 = vsel %vm255, %v33, 0
  %v281 = vsel %vm255, %v34, 0
  %v284 = vsel %vm255, %v35, 0
  %v287 = vsel %vm255, %v36, 0
  %v290 = vsel %vm255, %v37, 0
  %v293 = vsel %vm255, %v38, 0
  %v296 = vsel %vm255, %v39, 0
  %v299 = vsel %vm255, %v40, 0
  %v302 = vsel %vm255, %v41, 0
  %304 = vmatprep.subr.mxu0 0.0
  %305 = vmatpush1.msra.mxu0 %v42
  %306 = vmatprep.subr.mxu0 0.0
  %307 = vmatpush1.msra.mxu0 %v43
  %308 = vmatprep.subr.mxu0 0.0
  %309 = vmatpush1.msra.mxu0 0.0
  %310 = vmatprep.subr.mxu0 0.0
  %311 = vmatpush1.msra.mxu0 0.0
  %312 = vmatprep.subr.mxu0 0.0
  %313 = vmatpush1.msra.mxu0 0.0
  %314 = vmatprep.subr.mxu0 0.0
  %315 = vmatpush1.msra.mxu0 0.0
  %316 = vmatprep.subr.mxu0 0.0
  %317 = vmatpush1.msra.mxu0 0.0
  %318 = vmatprep.subr.mxu0 0.0
  %319 = vmatpush1.msra.mxu0 0.0
  %320 = vmatprep.subr.mxu0 0.0
  %321 = vmatpush1.msra.mxu0 0.0
  %322 = vmatprep.subr.mxu0 0.0
  %323 = vmatpush1.msra.mxu0 0.0
  %324 = vmatprep.subr.mxu0 0.0
  %325 = vmatpush1.msra.mxu0 0.0
  %326 = vmatprep.subr.mxu0 0.0
  %327 = vmatpush1.msra.mxu0 0.0
  %328 = vmatprep.subr.mxu0 0.0
  %329 = vmatpush1.msra.mxu0 0.0
  %330 = vmatprep.subr.mxu0 0.0
  %331 = vmatpush1.msra.mxu0 0.0
  %332 = vmatprep.subr.mxu0 0.0
  %333 = vmatpush1.msra.mxu0 0.0
  %334 = vmatprep.subr.mxu0 0.0
  %335 = vmatpush1.msra.mxu0 0.0
  %336 = vmatprep.subr.mxu0 0.0
  %337 = vmatpush1.msra.mxu0 0.0
  %338 = vmatprep.subr.mxu0 0.0
  %339 = vmatpush1.msra.mxu0 0.0
  %340 = vmatprep.subr.mxu0 0.0
  %341 = vmatpush1.msra.mxu0 0.0
  %342 = vmatprep.subr.mxu0 0.0
  %343 = vmatpush1.msra.mxu0 0.0
  %344 = vmatprep.subr.mxu0 0.0
  %345 = vmatpush1.msra.mxu0 0.0
  %346 = vmatprep.subr.mxu0 0.0
  %347 = vmatpush1.msra.mxu0 0.0
  %348 = vmatprep.subr.mxu0 0.0
  %349 = vmatpush1.msra.mxu0 0.0
  %350 = vmatprep.subr.mxu0 0.0
  %351 = vmatpush1.msra.mxu0 0.0
  %352 = vmatprep.subr.mxu0 0.0
  %353 = vmatpush1.msra.mxu0 0.0
  %354 = vmatprep.subr.mxu0 0.0
  %355 = vmatpush1.msra.mxu0 0.0
  %356 = vmatprep.subr.mxu0 0.0
  %357 = vmatpush1.msra.mxu0 0.0
  %358 = vmatprep.subr.mxu0 0.0
  %359 = vmatpush1.msra.mxu0 0.0
  %360 = vmatprep.subr.mxu0 0.0
  %361 = vmatpush1.msra.mxu0 0.0
  %362 = vmatprep.subr.mxu0 0.0
  %363 = vmatpush1.msra.mxu0 0.0
  %364 = vmatprep.subr.mxu0 0.0
  %365 = vmatpush1.msra.mxu0 0.0
  %366 = vmatprep.subr.mxu0 0.0
  %367 = vmatpush1.msra.mxu0 0.0
  %368 = vmatprep.mubr.f32.mxu0 0.0
  %369 = vmatmul.mubr.f32.gmra.mrb[0].mxu0 %v257
  %v370 = vpop.f32.mrb[0].mxu0
  %v371 = vadd.f32 %v177, %v370
  %v372 = vpop.f32.mrb[0].mxu0
  %373 = vmatprep.mubr.f32.mxu0 0.0
  %374 = vmatmul.mubr.f32.gmra.mrb[0].mxu0 %v260
  %v375 = vpop.f32.mrb[0].mxu0
  %v376 = vadd.f32 %v182, %v375
  %v377 = vpop.f32.mrb[0].mxu0
  %378 = vmatprep.mubr.f32.mxu0 0.0
  %379 = vmatmul.mubr.f32.gmra.mrb[0].mxu0 %v263
  %v380 = vpop.f32.mrb[0].mxu0
  %v381 = vadd.f32 %v187, %v380
  %v382 = vpop.f32.mrb[0].mxu0
  %383 = vmatprep.mubr.f32.mxu0 0.0
  %384 = vmatmul.mubr.f32.gmra.mrb[0].mxu0 %v266
  %v385 = vpop.f32.mrb[0].mxu0
  %v386 = vadd.f32 %v192, %v385
  %v387 = vpop.f32.mrb[0].mxu0
  %388 = vmatprep.mubr.f32.mxu0 0.0
  %389 = vmatmul.mubr.f32.gmra.mrb[0].mxu0 %v269
  %v390 = vpop.f32.mrb[0].mxu0
  %v391 = vadd.f32 %v197, %v390
  %v392 = vpop.f32.mrb[0].mxu0
  %393 = vmatprep.mubr.f32.mxu0 0.0
  %394 = vmatmul.mubr.f32.gmra.mrb[0].mxu0 %v272
  %v395 = vpop.f32.mrb[0].mxu0
  %v396 = vadd.f32 %v202, %v395
  %v397 = vpop.f32.mrb[0].mxu0
  %398 = vmatprep.mubr.f32.mxu0 0.0
  %399 = vmatmul.mubr.f32.gmra.mrb[0].mxu0 %v275
  %v400 = vpop.f32.mrb[0].mxu0
  %v401 = vadd.f32 %v207, %v400
  %v402 = vpop.f32.mrb[0].mxu0
  %403 = vmatprep.mubr.f32.mxu0 0.0
  %404 = vmatmul.mubr.f32.gmra.mrb[0].mxu0 %v278
  %v405 = vpop.f32.mrb[0].mxu0
  %v406 = vadd.f32 %v212, %v405
  %v407 = vpop.f32.mrb[0].mxu0
  %408 = vmatprep.mubr.f32.mxu0 0.0
  %409 = vmatmul.mubr.f32.gmra.mrb[0].mxu0 %v281
  %v410 = vpop.f32.mrb[0].mxu0
  %v411 = vadd.f32 %v217, %v410
  %v412 = vpop.f32.mrb[0].mxu0
  %413 = vmatprep.mubr.f32.mxu0 0.0
  %414 = vmatmul.mubr.f32.gmra.mrb[0].mxu0 %v284
  %v415 = vpop.f32.mrb[0].mxu0
  %v416 = vadd.f32 %v222, %v415
  %v417 = vpop.f32.mrb[0].mxu0
  %418 = vmatprep.mubr.f32.mxu0 0.0
  %419 = vmatmul.mubr.f32.gmra.mrb[0].mxu0 %v287
  %v420 = vpop.f32.mrb[0].mxu0
  %v421 = vadd.f32 %v227, %v420
  %v422 = vpop.f32.mrb[0].mxu0
  %423 = vmatprep.mubr.f32.mxu0 0.0
  %424 = vmatmul.mubr.f32.gmra.mrb[0].mxu0 %v290
  %v425 = vpop.f32.mrb[0].mxu0
  %v426 = vadd.f32 %v232, %v425
  %v427 = vpop.f32.mrb[0].mxu0
  %428 = vmatprep.mubr.f32.mxu0 0.0
  %429 = vmatmul.mubr.f32.gmra.mrb[0].mxu0 %v293
  %v430 = vpop.f32.mrb[0].mxu0
  %v431 = vadd.f32 %v237, %v430
  %v432 = vpop.f32.mrb[0].mxu0
  %433 = vmatprep.mubr.f32.mxu0 0.0
  %434 = vmatmul.mubr.f32.gmra.mrb[0].mxu0 %v296
  %v435 = vpop.f32.mrb[0].mxu0
  %v436 = vadd.f32 %v242, %v435
  %v437 = vpop.f32.mrb[0].mxu0
  %438 = vmatprep.mubr.f32.mxu0 0.0
  %439 = vmatmul.mubr.f32.gmra.mrb[0].mxu0 %v299
  %v440 = vpop.f32.mrb[0].mxu0
  %v441 = vadd.f32 %v247, %v440
  %v442 = vpop.f32.mrb[0].mxu0
  %443 = vmatprep.mubr.f32.mxu0 0.0
  %444 = vmatmul.mubr.f32.gmra.mrb[0].mxu0 %v302
  %v445 = vpop.f32.mrb[0].mxu0
  %v446 = vadd.f32 %v252, %v445
  %v447 = vpop.f32.mrb[0].mxu0
  %448 = vdwg.mxu0
  %v449 = vld [vmem:[%s4] sm:$0xff]
  %v450 = vld [vmem:[%s4 + $0x8] sm:$0xff]
  %v451 = vld [vmem:[%s4 + $0x10] sm:$0xff]
  %v452 = vld [vmem:[%s4 + $0x18] sm:$0xff]
  %v453 = vld [vmem:[%s4 + $0x20] sm:$0xff]
  %v454 = vld [vmem:[%s4 + $0x28] sm:$0xff]
  %v455 = vld [vmem:[%s4 + $0x30] sm:$0xff]
  %v456 = vld [vmem:[%s4 + $0x38] sm:$0xff]
  %v457 = vld [vmem:[%s4 + $0x40] sm:$0xff]
  %v458 = vld [vmem:[%s4 + $0x48] sm:$0xff]
  %v459 = vld [vmem:[%s4 + $0x50] sm:$0xff]
  %v460 = vld [vmem:[%s4 + $0x58] sm:$0xff]
  %v461 = vld [vmem:[%s4 + $0x60] sm:$0xff]
  %v462 = vld [vmem:[%s4 + $0x68] sm:$0xff]
  %v463 = vld [vmem:[%s4 + $0x70] sm:$0xff]
  %v464 = vld [vmem:[%s4 + $0x78] sm:$0xff]
  %466 = vset.pattern.permute.xlu0 0
  %467 = vperm.xlu0 %466, %v449
  %v468 = vpop.permute.xlu0 %467
  %471 = vset.pattern.permute.xlu0 0
  %472 = vperm.xlu0 %471, %v450
  %v473 = vpop.permute.xlu0 %472
  %476 = vset.pattern.permute.xlu0 0
  %477 = vperm.xlu0 %476, %v451
  %v478 = vpop.permute.xlu0 %477
  %481 = vset.pattern.permute.xlu0 0
  %482 = vperm.xlu0 %481, %v452
  %v483 = vpop.permute.xlu0 %482
  %486 = vset.pattern.permute.xlu0 0
  %487 = vperm.xlu0 %486, %v453
  %v488 = vpop.permute.xlu0 %487
  %491 = vset.pattern.permute.xlu0 0
  %492 = vperm.xlu0 %491, %v454
  %v493 = vpop.permute.xlu0 %492
  %496 = vset.pattern.permute.xlu0 0
  %497 = vperm.xlu0 %496, %v455
  %v498 = vpop.permute.xlu0 %497
  %501 = vset.pattern.permute.xlu0 0
  %502 = vperm.xlu0 %501, %v456
  %v503 = vpop.permute.xlu0 %502
  %506 = vset.pattern.permute.xlu0 0
  %507 = vperm.xlu0 %506, %v457
  %v508 = vpop.permute.xlu0 %507
  %511 = vset.pattern.permute.xlu0 0
  %512 = vperm.xlu0 %511, %v458
  %v513 = vpop.permute.xlu0 %512
  %516 = vset.pattern.permute.xlu0 0
  %517 = vperm.xlu0 %516, %v459
  %v518 = vpop.permute.xlu0 %517
  %521 = vset.pattern.permute.xlu0 0
  %522 = vperm.xlu0 %521, %v460
  %v523 = vpop.permute.xlu0 %522
  %526 = vset.pattern.permute.xlu0 0
  %527 = vperm.xlu0 %526, %v461
  %v528 = vpop.permute.xlu0 %527
  %531 = vset.pattern.permute.xlu0 0
  %532 = vperm.xlu0 %531, %v462
  %v533 = vpop.permute.xlu0 %532
  %536 = vset.pattern.permute.xlu0 0
  %537 = vperm.xlu0 %536, %v463
  %v538 = vpop.permute.xlu0 %537
  %541 = vset.pattern.permute.xlu0 0
  %542 = vperm.xlu0 %541, %v464
  %v543 = vpop.permute.xlu0 %542
  %v545 = vadd.f32 %v371, %v468
  %v546 = vadd.f32 %v376, %v473
  %v547 = vadd.f32 %v381, %v478
  %v548 = vadd.f32 %v386, %v483
  %v549 = vadd.f32 %v391, %v488
  %v550 = vadd.f32 %v396, %v493
  %v551 = vadd.f32 %v401, %v498
  %v552 = vadd.f32 %v406, %v503
  %v553 = vadd.f32 %v411, %v508
  %v554 = vadd.f32 %v416, %v513
  %v555 = vadd.f32 %v421, %v518
  %v556 = vadd.f32 %v426, %v523
  %v557 = vadd.f32 %v431, %v528
  %v558 = vadd.f32 %v436, %v533
  %v559 = vadd.f32 %v441, %v538
  %v560 = vadd.f32 %v446, %v543
  %v561 = vmax.f32 %v545, 0.0
  %v562 = vmax.f32 %v546, 0.0
  %v563 = vmax.f32 %v547, 0.0
  %v564 = vmax.f32 %v548, 0.0
  %v565 = vmax.f32 %v549, 0.0
  %v566 = vmax.f32 %v550, 0.0
  %v567 = vmax.f32 %v551, 0.0
  %v568 = vmax.f32 %v552, 0.0
  %v569 = vmax.f32 %v553, 0.0
  %v570 = vmax.f32 %v554, 0.0
  %v571 = vmax.f32 %v555, 0.0
  %v572 = vmax.f32 %v556, 0.0
  %v573 = vmax.f32 %v557, 0.0
  %v574 = vmax.f32 %v558, 0.0
  %v575 = vmax.f32 %v559, 0.0
  %v576 = vmax.f32 %v560, 0.0
  %v577 = vld [vmem:[%s5] sm:$0x3]
  %v578 = vld [vmem:[%s6] sm:$0x3]
  %580 = vset.pattern.permute.xlu0 0
  %581 = vperm.xlu0 %580, %v578
  %v582 = vpop.permute.xlu0 %581
  %584 = vmatprep.subr.mxu0 0.0
  %585 = vmatpush1.msra.mxu0 %v561
  %586 = vmatprep.subr.mxu0 0.0
  %587 = vmatpush1.msra.mxu0 %v562
  %588 = vmatprep.subr.mxu0 0.0
  %589 = vmatpush1.msra.mxu0 %v563
  %590 = vmatprep.subr.mxu0 0.0
  %591 = vmatpush1.msra.mxu0 %v564
  %592 = vmatprep.subr.mxu0 0.0
  %593 = vmatpush1.msra.mxu0 %v565
  %594 = vmatprep.subr.mxu0 0.0
  %595 = vmatpush1.msra.mxu0 %v566
  %596 = vmatprep.subr.mxu0 0.0
  %597 = vmatpush1.msra.mxu0 %v567
  %598 = vmatprep.subr.mxu0 0.0
  %599 = vmatpush1.msra.mxu0 %v568
  %600 = vmatprep.subr.mxu0 0.0
  %601 = vmatpush1.msra.mxu0 %v569
  %602 = vmatprep.subr.mxu0 0.0
  %603 = vmatpush1.msra.mxu0 %v570
  %604 = vmatprep.subr.mxu0 0.0
  %605 = vmatpush1.msra.mxu0 %v571
  %606 = vmatprep.subr.mxu0 0.0
  %607 = vmatpush1.msra.mxu0 %v572
  %608 = vmatprep.subr.mxu0 0.0
  %609 = vmatpush1.msra.mxu0 %v573
  %610 = vmatprep.subr.mxu0 0.0
  %611 = vmatpush1.msra.mxu0 %v574
  %612 = vmatprep.subr.mxu0 0.0
  %613 = vmatpush1.msra.mxu0 %v575
  %614 = vmatprep.subr.mxu0 0.0
  %615 = vmatpush1.msra.mxu0 %v576
  %616 = vmatprep.subr.mxu0 0.0
  %617 = vmatpush1.msra.mxu0 0.0
  %618 = vmatprep.subr.mxu0 0.0
  %619 = vmatpush1.msra.mxu0 0.0
  %620 = vmatprep.subr.mxu0 0.0
  %621 = vmatpush1.msra.mxu0 0.0
  %622 = vmatprep.subr.mxu0 0.0
  %623 = vmatpush1.msra.mxu0 0.0
  %624 = vmatprep.subr.mxu0 0.0
  %625 = vmatpush1.msra.mxu0 0.0
  %626 = vmatprep.subr.mxu0 0.0
  %627 = vmatpush1.msra.mxu0 0.0
  %628 = vmatprep.subr.mxu0 0.0
  %629 = vmatpush1.msra.mxu0 0.0
  %630 = vmatprep.subr.mxu0 0.0
  %631 = vmatpush1.msra.mxu0 0.0
  %632 = vmatprep.subr.mxu0 0.0
  %633 = vmatpush1.msra.mxu0 0.0
  %634 = vmatprep.subr.mxu0 0.0
  %635 = vmatpush1.msra.mxu0 0.0
  %636 = vmatprep.subr.mxu0 0.0
  %637 = vmatpush1.msra.mxu0 0.0
  %638 = vmatprep.subr.mxu0 0.0
  %639 = vmatpush1.msra.mxu0 0.0
  %640 = vmatprep.subr.mxu0 0.0
  %641 = vmatpush1.msra.mxu0 0.0
  %642 = vmatprep.subr.mxu0 0.0
  %643 = vmatpush1.msra.mxu0 0.0
  %644 = vmatprep.subr.mxu0 0.0
  %645 = vmatpush1.msra.mxu0 0.0
  %646 = vmatprep.subr.mxu0 0.0
  %647 = vmatpush1.msra.mxu0 0.0
  %648 = vmatprep.mubr.f32.mxu0 0.0
  %649 = vmatmul.mubr.f32.gmra.mrb[0].mxu0 %v577
  %v650 = vpop.f32.mrb[0].mxu0
  %v651 = vadd.f32 %v582, %v650
  %v652 = vpop.f32.mrb[0].mxu0
  %653 = vdwg.mxu0
  %vm654 = vcmask 58368
  %655 = vst.msk [vmem:[%s7] sm:$0x3] %vm654, %v651
  // Predicated region
  $region30: #{fuse_grunet_forward.1} parent=0 // pred_check
    _
  $region31: #{fuse_grunet_forward.1} parent=0 // pred_check_branch
    %657 = sbr.rel (0) target = $region33
  $region32: #{fuse_grunet_forward.1} parent=0 // pred_region
    _
  $region33: #{fuse_grunet_forward.1} parent=0 // pred_fallthru
    _
  // Predicated region
  $region34: #{fuse_grunet_forward.1} parent=0 // pred_check
    _
  $region35: #{fuse_grunet_forward.1} parent=0 // pred_check_branch
    %659 = sbr.rel (0) target = $region37
  $region36: #{fuse_grunet_forward.1} parent=0 // pred_region
    _
  $region37: #{fuse_grunet_forward.1} parent=0 // pred_fallthru
    _

</llo_original>
